<compile_context>
chip_gen: v7x
topology: tpu7x:2x2x1
jax: 0.10.0
libtpu: 0.0.40
codegen_flags: <defaults>
</compile_context>

<pallas_src>
import jax
import jax.numpy as jnp
from jax.experimental import pallas as pl
from jax.experimental.pallas import tpu as pltpu

RRELU_SLOPE = (1.0 / 8.0 + 1.0 / 3.0) / 2.0  # 11/48 (torch.rrelu eval mode)
LANE = 128


def _rrelu(x):
    return jnp.where(x >= 0, x, x * RRELU_SLOPE)


def _round_up(n, m):
    return ((n + m - 1) // m) * m


def _pad_to(a, shape):
    pads = [(0, t - s) for s, t in zip(a.shape, shape)]
    return jnp.pad(a, pads)


def mlp_kernel(x_ref, w1_ref, b1_ref, w2_ref, b2_ref, w3_ref, b3_ref,
               w4_ref, b4_ref, o_ref):
    # bf16 operands -> MXU, f32 accumulation; bias + activation in f32.
    h = jnp.dot(x_ref[...], w1_ref[...], preferred_element_type=jnp.float32)
    h = _rrelu(h + b1_ref[...])                                   # Linear + rrelu
    h = jnp.dot(h.astype(jnp.bfloat16), w2_ref[...],
                preferred_element_type=jnp.float32)
    h = jax.nn.sigmoid(h + b2_ref[...])                           # Linear + sigmoid
    h = jnp.dot(h.astype(jnp.bfloat16), w3_ref[...],
                preferred_element_type=jnp.float32)
    h = _rrelu(h + b3_ref[...])                                   # Linear + rrelu
    h = jnp.dot(h.astype(jnp.bfloat16), w4_ref[...],
                preferred_element_type=jnp.float32)
    h = _rrelu(h + b4_ref[...])                                   # Linear + rrelu
    o_ref[...] = h.astype(o_ref.dtype)


def neurel_network_forward(x, params, *, bm=256):
    """x: (B, input_size) float32. params: dict of w1..w4 (in,out), b1..b4 (1,out)."""
    B, in_dim = x.shape
    h1 = params["w1"].shape[1]          # 150
    h2 = params["w2"].shape[1]          # 125
    h3 = params["w3"].shape[1]          # 125
    out_dim = params["w4"].shape[1]

    # Lane-dense (128-multiple) feature dims.
    d_in = _round_up(in_dim, LANE)
    d1 = _round_up(h1, LANE)
    d2 = _round_up(h2, LANE)
    d3 = _round_up(h3, LANE)
    d_out = _round_up(out_dim, LANE)

    # Batch tiling: cdiv grid, balanced tile (multiple of 8 sublanes), padded tail.
    num_tiles = max(pl.cdiv(B, bm), 1)
    if B >= 2 * LANE:
        num_tiles = max(num_tiles, 2)   # keep both v7x TensorCores busy
    bm_eff = _round_up(pl.cdiv(B, num_tiles), 8)
    Bp = bm_eff * num_tiles

    # bf16 matmul operands; f32 biases.
    xp = _pad_to(x, (Bp, d_in)).astype(jnp.bfloat16)
    w1 = _pad_to(params["w1"], (d_in, d1)).astype(jnp.bfloat16)
    w2 = _pad_to(params["w2"], (d1, d2)).astype(jnp.bfloat16)
    w3 = _pad_to(params["w3"], (d2, d3)).astype(jnp.bfloat16)
    w4 = _pad_to(params["w4"], (d3, d_out)).astype(jnp.bfloat16)
    b1 = _pad_to(params["b1"], (1, d1)).astype(jnp.float32)
    b2 = _pad_to(params["b2"], (1, d2)).astype(jnp.float32)
    b3 = _pad_to(params["b3"], (1, d3)).astype(jnp.float32)
    b4 = _pad_to(params["b4"], (1, d_out)).astype(jnp.float32)

    def const_spec(arr):
        # Whole array as one block; constant block index -> fetched once,
        # resident in VMEM for the whole grid (weights total ~180 KB).
        return pl.BlockSpec(arr.shape, lambda i: (0, 0))

    out = pl.pallas_call(
        mlp_kernel,
        out_shape=jax.ShapeDtypeStruct((Bp, d_out), jnp.float32),
        grid_spec=pltpu.PrefetchScalarGridSpec(
            num_scalar_prefetch=0,
            grid=(num_tiles,),
            in_specs=[
                pl.BlockSpec((bm_eff, d_in), lambda i: (i, 0)),
                const_spec(w1), const_spec(b1),
                const_spec(w2), const_spec(b2),
                const_spec(w3), const_spec(b3),
                const_spec(w4), const_spec(b4),
            ],
            out_specs=pl.BlockSpec((bm_eff, d_out), lambda i: (i, 0)),
        ),
        compiler_params=pltpu.CompilerParams(
            dimension_semantics=("parallel",)),
    )(xp, w1, b1, w2, b2, w3, b3, w4, b4)

    return out[:B, :out_dim]


def init_params(key, input_size, output_size):
    """Deterministic init mimicking nn.Linear default (uniform +/- 1/sqrt(fan_in))."""
    dims = [(input_size, 150), (150, 125), (125, 125), (125, output_size)]
    params = {}
    for idx, (fan_in, fan_out) in enumerate(dims, start=1):
        key, kw, kb = jax.random.split(key, 3)
        bound = 1.0 / jnp.sqrt(fan_in)
        params[f"w{idx}"] = jax.random.uniform(
            kw, (fan_in, fan_out), jnp.float32, -bound, bound)
        params[f"b{idx}"] = jax.random.uniform(
            kb, (1, fan_out), jnp.float32, -bound, bound)
    return params


def reference_forward_mixed(x, params):
    """Pure-JAX reference with the same bf16-operand / f32-accumulate precision."""
    def dot_bf16(a, w):
        return jnp.dot(a.astype(jnp.bfloat16), w.astype(jnp.bfloat16),
                       preferred_element_type=jnp.float32)
    h = _rrelu(dot_bf16(x, params["w1"]) + params["b1"])
    h = jax.nn.sigmoid(dot_bf16(h, params["w2"]) + params["b2"])
    h = _rrelu(dot_bf16(h, params["w3"]) + params["b3"])
    h = _rrelu(dot_bf16(h, params["w4"]) + params["b4"])
    return h


def reference_forward_f32(x, params):
    h = _rrelu(x @ params["w1"] + params["b1"])
    h = jax.nn.sigmoid(h @ params["w2"] + params["b2"])
    h = _rrelu(h @ params["w3"] + params["b3"])
    h = _rrelu(h @ params["w4"] + params["b4"])
    return h


if __name__ == "__main__":
    key = jax.random.PRNGKey(0)
    input_size, output_size, batch = 64, 10, 16

    key, kx = jax.random.split(key)
    x = jax.random.normal(kx, (batch, input_size), jnp.float32)
    params = init_params(key, input_size, output_size)

    out = neurel_network_forward(x, params)
    out = jax.block_until_ready(out)
    assert out.shape == (batch, output_size)

    ref_mixed = reference_forward_mixed(x, params)
    assert jnp.allclose(out, ref_mixed, atol=1e-3, rtol=1e-3), \
        "mismatch vs mixed-precision reference"
    ref_f32 = reference_forward_f32(x, params)
    assert jnp.allclose(out, ref_f32, atol=5e-2, rtol=5e-2), \
        "mismatch vs f32 reference"

    # Non-multiple batch exercises the cdiv grid + padded-tail path.
    key, kx2 = jax.random.split(key)
    x2 = jax.random.normal(kx2, (13, input_size), jnp.float32)
    out2 = jax.block_until_ready(neurel_network_forward(x2, params))
    assert out2.shape == (13, output_size)
    assert jnp.allclose(out2, reference_forward_mixed(x2, params),
                        atol=1e-3, rtol=1e-3), "mismatch on odd batch"

    print("KERNEL_OK")
</pallas_src>

<mosaic_0001>
module attributes {stable_mosaic.version = 11 : i64} {
  func.func @mlp_kernel(%arg0: i32, %arg1: memref<16x128xbf16, #tpu.memory_space<vmem>>, %arg2: memref<128x256xbf16, #tpu.memory_space<vmem>>, %arg3: memref<1x256xf32, #tpu.memory_space<vmem>>, %arg4: memref<256x128xbf16, #tpu.memory_space<vmem>>, %arg5: memref<1x128xf32, #tpu.memory_space<vmem>>, %arg6: memref<128x128xbf16, #tpu.memory_space<vmem>>, %arg7: memref<1x128xf32, #tpu.memory_space<vmem>>, %arg8: memref<128x128xbf16, #tpu.memory_space<vmem>>, %arg9: memref<1x128xf32, #tpu.memory_space<vmem>>, %arg10: memref<16x128xf32, #tpu.memory_space<vmem>>) attributes {dimension_semantics = [#tpu.dimension_semantics<parallel>], iteration_bounds = array<i64: 1>, scalar_prefetch = 0 : i64, scratch_operands = 0 : i64, tpu.core_type = #tpu.core_type<tc>, window_params = [{transform_indices = @transform_0, window_bounds = array<i64: 16, 128>}, {pipeline_mode = #tpu.pipeline_mode<synchronous>, transform_indices = @transform_1, window_bounds = array<i64: 128, 256>}, {pipeline_mode = #tpu.pipeline_mode<synchronous>, transform_indices = @transform_2, window_bounds = array<i64: 1, 256>}, {pipeline_mode = #tpu.pipeline_mode<synchronous>, transform_indices = @transform_3, window_bounds = array<i64: 256, 128>}, {pipeline_mode = #tpu.pipeline_mode<synchronous>, transform_indices = @transform_4, window_bounds = array<i64: 1, 128>}, {pipeline_mode = #tpu.pipeline_mode<synchronous>, transform_indices = @transform_5, window_bounds = array<i64: 128, 128>}, {pipeline_mode = #tpu.pipeline_mode<synchronous>, transform_indices = @transform_6, window_bounds = array<i64: 1, 128>}, {pipeline_mode = #tpu.pipeline_mode<synchronous>, transform_indices = @transform_7, window_bounds = array<i64: 128, 128>}, {pipeline_mode = #tpu.pipeline_mode<synchronous>, transform_indices = @transform_8, window_bounds = array<i64: 1, 128>}, {transform_indices = @transform_9, window_bounds = array<i64: 16, 128>}]} {
    %c0 = arith.constant 0 : index
    %c0_0 = arith.constant 0 : index
    %0 = vector.load %arg1[%c0, %c0_0] : memref<16x128xbf16, #tpu.memory_space<vmem>>, vector<16x128xbf16>
    %c0_1 = arith.constant 0 : index
    %c0_2 = arith.constant 0 : index
    %1 = vector.load %arg2[%c0_1, %c0_2] : memref<128x256xbf16, #tpu.memory_space<vmem>>, vector<128x256xbf16>
    %cst = arith.constant dense<0.000000e+00> : vector<16x256xf32>
    %2 = tpu.matmul %0, %1, %cst {dimension_numbers = #tpu.dot_dimension_numbers<[1], [0], [0], [1], [0, 0, 1, 1], [], []>} : vector<16x128xbf16>, vector<128x256xbf16>, vector<16x256xf32> -> vector<16x256xf32>
    %c0_3 = arith.constant 0 : index
    %c0_4 = arith.constant 0 : index
    %3 = vector.load %arg3[%c0_3, %c0_4] : memref<1x256xf32, #tpu.memory_space<vmem>>, vector<1x256xf32>
    %4 = vector.broadcast %3 : vector<1x256xf32> to vector<16x256xf32>
    %5 = arith.addf %2, %4 : vector<16x256xf32>
    %cst_5 = arith.constant 0.000000e+00 : f32
    %6 = vector.broadcast %cst_5 : f32 to vector<16x256xf32>
    %7 = arith.cmpf oge, %5, %6 : vector<16x256xf32>
    %cst_6 = arith.constant 0.229166672 : f32
    %8 = vector.broadcast %cst_6 : f32 to vector<16x256xf32>
    %9 = arith.mulf %5, %8 : vector<16x256xf32>
    %10 = arith.select %7, %5, %9 : vector<16x256xi1>, vector<16x256xf32>
    %11 = arith.truncf %10 : vector<16x256xf32> to vector<16x256xbf16>
    %c0_7 = arith.constant 0 : index
    %c0_8 = arith.constant 0 : index
    %12 = vector.load %arg4[%c0_7, %c0_8] : memref<256x128xbf16, #tpu.memory_space<vmem>>, vector<256x128xbf16>
    %cst_9 = arith.constant dense<0.000000e+00> : vector<16x128xf32>
    %13 = tpu.matmul %11, %12, %cst_9 {dimension_numbers = #tpu.dot_dimension_numbers<[1], [0], [0], [1], [0, 0, 1, 1], [], []>} : vector<16x256xbf16>, vector<256x128xbf16>, vector<16x128xf32> -> vector<16x128xf32>
    %c0_10 = arith.constant 0 : index
    %c0_11 = arith.constant 0 : index
    %14 = vector.load %arg5[%c0_10, %c0_11] : memref<1x128xf32, #tpu.memory_space<vmem>>, vector<1x128xf32>
    %15 = vector.broadcast %14 : vector<1x128xf32> to vector<16x128xf32>
    %16 = arith.addf %13, %15 : vector<16x128xf32>
    %17 = arith.negf %16 : vector<16x128xf32>
    %18 = math.exp %17 : vector<16x128xf32>
    %cst_12 = arith.constant 1.000000e+00 : f32
    %19 = vector.broadcast %cst_12 : f32 to vector<16x128xf32>
    %20 = arith.addf %19, %18 : vector<16x128xf32>
    %21 = arith.divf %19, %20 : vector<16x128xf32>
    %22 = arith.truncf %21 : vector<16x128xf32> to vector<16x128xbf16>
    %c0_13 = arith.constant 0 : index
    %c0_14 = arith.constant 0 : index
    %23 = vector.load %arg6[%c0_13, %c0_14] : memref<128x128xbf16, #tpu.memory_space<vmem>>, vector<128x128xbf16>
    %cst_15 = arith.constant dense<0.000000e+00> : vector<16x128xf32>
    %24 = tpu.matmul %22, %23, %cst_15 {dimension_numbers = #tpu.dot_dimension_numbers<[1], [0], [0], [1], [0, 0, 1, 1], [], []>} : vector<16x128xbf16>, vector<128x128xbf16>, vector<16x128xf32> -> vector<16x128xf32>
    %c0_16 = arith.constant 0 : index
    %c0_17 = arith.constant 0 : index
    %25 = vector.load %arg7[%c0_16, %c0_17] : memref<1x128xf32, #tpu.memory_space<vmem>>, vector<1x128xf32>
    %26 = vector.broadcast %25 : vector<1x128xf32> to vector<16x128xf32>
    %27 = arith.addf %24, %26 : vector<16x128xf32>
    %cst_18 = arith.constant 0.000000e+00 : f32
    %28 = vector.broadcast %cst_18 : f32 to vector<16x128xf32>
    %29 = arith.cmpf oge, %27, %28 : vector<16x128xf32>
    %cst_19 = arith.constant 0.229166672 : f32
    %30 = vector.broadcast %cst_19 : f32 to vector<16x128xf32>
    %31 = arith.mulf %27, %30 : vector<16x128xf32>
    %32 = arith.select %29, %27, %31 : vector<16x128xi1>, vector<16x128xf32>
    %33 = arith.truncf %32 : vector<16x128xf32> to vector<16x128xbf16>
    %c0_20 = arith.constant 0 : index
    %c0_21 = arith.constant 0 : index
    %34 = vector.load %arg8[%c0_20, %c0_21] : memref<128x128xbf16, #tpu.memory_space<vmem>>, vector<128x128xbf16>
    %cst_22 = arith.constant dense<0.000000e+00> : vector<16x128xf32>
    %35 = tpu.matmul %33, %34, %cst_22 {dimension_numbers = #tpu.dot_dimension_numbers<[1], [0], [0], [1], [0, 0, 1, 1], [], []>} : vector<16x128xbf16>, vector<128x128xbf16>, vector<16x128xf32> -> vector<16x128xf32>
    %c0_23 = arith.constant 0 : index
    %c0_24 = arith.constant 0 : index
    %36 = vector.load %arg9[%c0_23, %c0_24] : memref<1x128xf32, #tpu.memory_space<vmem>>, vector<1x128xf32>
    %37 = vector.broadcast %36 : vector<1x128xf32> to vector<16x128xf32>
    %38 = arith.addf %35, %37 : vector<16x128xf32>
    %cst_25 = arith.constant 0.000000e+00 : f32
    %39 = vector.broadcast %cst_25 : f32 to vector<16x128xf32>
    %40 = arith.cmpf oge, %38, %39 : vector<16x128xf32>
    %cst_26 = arith.constant 0.229166672 : f32
    %41 = vector.broadcast %cst_26 : f32 to vector<16x128xf32>
    %42 = arith.mulf %38, %41 : vector<16x128xf32>
    %43 = arith.select %40, %38, %42 : vector<16x128xi1>, vector<16x128xf32>
    %c0_27 = arith.constant 0 : index
    %c0_28 = arith.constant 0 : index
    %44 = vector.load %arg10[%c0_27, %c0_28] : memref<16x128xf32, #tpu.memory_space<vmem>>, vector<16x128xf32>
    tpu.vector_store %arg10[%c0_27, %c0_28], %43 {strides = array<i32>} : memref<16x128xf32, #tpu.memory_space<vmem>>, vector<16x128xf32>,
    return
  }
  func.func @transform_0(%arg0: i32) -> (i32, i32) {
    %c0_i32 = arith.constant 0 : i32
    %c0_i32_0 = arith.constant 0 : i32
    return %arg0, %c0_i32 : i32, i32
  }
  func.func @transform_1(%arg0: i32) -> (i32, i32) {
    %c0_i32 = arith.constant 0 : i32
    %c0_i32_0 = arith.constant 0 : i32
    %c0_i32_1 = arith.constant 0 : i32
    return %c0_i32, %c0_i32_0 : i32, i32
  }
  func.func @transform_2(%arg0: i32) -> (i32, i32) {
    %c0_i32 = arith.constant 0 : i32
    %c0_i32_0 = arith.constant 0 : i32
    %c0_i32_1 = arith.constant 0 : i32
    return %c0_i32, %c0_i32_0 : i32, i32
  }
  func.func @transform_3(%arg0: i32) -> (i32, i32) {
    %c0_i32 = arith.constant 0 : i32
    %c0_i32_0 = arith.constant 0 : i32
    %c0_i32_1 = arith.constant 0 : i32
    return %c0_i32, %c0_i32_0 : i32, i32
  }
  func.func @transform_4(%arg0: i32) -> (i32, i32) {
    %c0_i32 = arith.constant 0 : i32
    %c0_i32_0 = arith.constant 0 : i32
    %c0_i32_1 = arith.constant 0 : i32
    return %c0_i32, %c0_i32_0 : i32, i32
  }
  func.func @transform_5(%arg0: i32) -> (i32, i32) {
    %c0_i32 = arith.constant 0 : i32
    %c0_i32_0 = arith.constant 0 : i32
    %c0_i32_1 = arith.constant 0 : i32
    return %c0_i32, %c0_i32_0 : i32, i32
  }
  func.func @transform_6(%arg0: i32) -> (i32, i32) {
    %c0_i32 = arith.constant 0 : i32
    %c0_i32_0 = arith.constant 0 : i32
    %c0_i32_1 = arith.constant 0 : i32
    return %c0_i32, %c0_i32_0 : i32, i32
  }
  func.func @transform_7(%arg0: i32) -> (i32, i32) {
    %c0_i32 = arith.constant 0 : i32
    %c0_i32_0 = arith.constant 0 : i32
    %c0_i32_1 = arith.constant 0 : i32
    return %c0_i32, %c0_i32_0 : i32, i32
  }
  func.func @transform_8(%arg0: i32) -> (i32, i32) {
    %c0_i32 = arith.constant 0 : i32
    %c0_i32_0 = arith.constant 0 : i32
    %c0_i32_1 = arith.constant 0 : i32
    return %c0_i32, %c0_i32_0 : i32, i32
  }
  func.func @transform_9(%arg0: i32) -> (i32, i32) {
    %c0_i32 = arith.constant 0 : i32
    %c0_i32_0 = arith.constant 0 : i32
    return %arg0, %c0_i32 : i32, i32
  }
}

</mosaic_0001>

<llo_original>
// kernel: tpu_custom_call.1
$region0: #{tpu_custom_call.1}
  #allocation0 [shape = 'u32[]', space=smem, size = 0x4, offset = 0x4, fixed_abs, tag = 'smem constant byte address 0x4 - core index']
  #allocation1 [shape = 'u32[144,128]{1,0:T(1,128)}', space=vmem, size = 0x12000, scoped, tag = 'internal scratch']
  %s0 = inlined_call_operand.hbm [shape: bf16[16,128], index: 0, kind: input, shape index: {}]
  %s1 = inlined_call_operand.hbm [shape: bf16[128,256], index: 1, kind: input, shape index: {}]
  %s2 = inlined_call_operand.vmem [shape: f32[1,256], index: 2, kind: input, shape index: {}]
  %s3 = inlined_call_operand.hbm [shape: bf16[256,128], index: 3, kind: input, shape index: {}]
  %s4 = inlined_call_operand.vmem [shape: f32[1,128], index: 4, kind: input, shape index: {}]
  %s5 = inlined_call_operand.hbm [shape: bf16[128,128], index: 5, kind: input, shape index: {}]
  %s6 = inlined_call_operand.vmem [shape: f32[1,128], index: 6, kind: input, shape index: {}]
  %s7 = inlined_call_operand.hbm [shape: bf16[128,128], index: 7, kind: input, shape index: {}]
  %s8 = inlined_call_operand.vmem [shape: f32[1,128], index: 8, kind: input, shape index: {}]
  %s9 = inlined_call_operand.hbm [shape: f32[16,128], index: 9, kind: output, shape index: {}]
  %s10 = sld [smem:[#allocation0]]
  $region66: #{tpu_custom_call.1} parent=0
    _
  %s12 = ssub.s32 1, %s10
  %s13 = scalar_select 0, %s12, %s10
  $region1: #{tpu_custom_call.1} parent=0
    #allocation2 [shape = 'u8[4096]{0}', space=vmem, size = 0x1000, scoped, tag = 'input window, operand 0, single buffered']
    #allocation3 [shape = 's32[1]{0}', space=sflag, size = 0x4, scoped, tag = 'scoped memory for tpu_custom_call.1']
    #allocation4 [shape = 's32[1]{0}', space=sflag, size = 0x4, scoped, tag = 'scoped memory for tpu_custom_call.1']
    #allocation5 [shape = 'u8[65536]{0}', space=vmem, size = 0x10000, scoped, tag = 'input window, operand 1, single buffered']
    #allocation6 [shape = 's32[1]{0}', space=sflag, size = 0x4, scoped, tag = 'scoped memory for tpu_custom_call.1']
    #allocation7 [shape = 'u8[65536]{0}', space=vmem, size = 0x10000, scoped, tag = 'input window, operand 3, single buffered']
    #allocation8 [shape = 'u8[32768]{0}', space=vmem, size = 0x8000, scoped, tag = 'input window, operand 5, single buffered']
    #allocation9 [shape = 's32[1]{0}', space=sflag, size = 0x4, scoped, tag = 'scoped memory for tpu_custom_call.1']
    #allocation10 [shape = 'u8[32768]{0}', space=vmem, size = 0x8000, scoped, tag = 'input window, operand 7, single buffered']
    #allocation11 [shape = 'u8[8192]{0}', space=vmem, size = 0x2000, scoped, tag = 'output window, operand 0, single buffered']
    %14 = vsyncpa [#allocation3], 0
    %15 = vsyncpa [#allocation6], 0
    %16 = vsyncpa [#allocation9], 0
    %17 = vsyncpa [#allocation4], 0
    // Predicated region
    $region2: #{tpu_custom_call.1} parent=1 // pred_check
      _
    $region3: #{tpu_custom_call.1} parent=1 // pred_check_branch
      %19 = sbr.rel (0) target = $region5
    $region4: #{tpu_custom_call.1} parent=1 // pred_region
      %s21 = ssub.s32 128, 128
      %22 = vsyncadd [#allocation3], %s21
      %s23 = sshll.u32 [#allocation2], 4
      %s24 = int_to_ptr.vmem [resolvable:$true] %s23
      %29 = dma.hbm_to_vmem [thread:$0]  %s0, 128, %s24, [#allocation3], 64, 64, 4
    $region5: #{tpu_custom_call.1} parent=1 // pred_fallthru
      _
    // Predicated region
    $region6: #{tpu_custom_call.1} parent=1 // pred_check
      _
    $region7: #{tpu_custom_call.1} parent=1 // pred_check_branch
      %31 = sbr.rel (0) target = $region9
    $region8: #{tpu_custom_call.1} parent=1 // pred_region
      %s33 = ssub.s32 2048, 2048
      %34 = vsyncadd [#allocation6], %s33
      %s35 = sshll.u32 [#allocation5], 4
      %s36 = int_to_ptr.vmem [resolvable:$true] %s35
      %41 = dma.hbm_to_vmem [thread:$0]  %s1, 2048, %s36, [#allocation6], 128, 128, 8
    $region9: #{tpu_custom_call.1} parent=1 // pred_fallthru
      _
    // Predicated region
    $region10: #{tpu_custom_call.1} parent=1 // pred_check
      _
    $region11: #{tpu_custom_call.1} parent=1 // pred_check_branch
      %43 = sbr.rel (0) target = $region13
    $region12: #{tpu_custom_call.1} parent=1 // pred_region
      _
    $region13: #{tpu_custom_call.1} parent=1 // pred_fallthru
      _
    // Predicated region
    $region14: #{tpu_custom_call.1} parent=1 // pred_check
      _
    $region15: #{tpu_custom_call.1} parent=1 // pred_check_branch
      %45 = sbr.rel (0) target = $region17
    $region16: #{tpu_custom_call.1} parent=1 // pred_region
      %s47 = ssub.s32 2048, 2048
      %48 = vsyncadd [#allocation6], %s47
      %s49 = sshll.u32 [#allocation7], 4
      %s50 = int_to_ptr.vmem [resolvable:$true] %s49
      %55 = dma.hbm_to_vmem [thread:$0]  %s3, 2048, %s50, [#allocation6], 64, 64, 4
    $region17: #{tpu_custom_call.1} parent=1 // pred_fallthru
      _
    // Predicated region
    $region18: #{tpu_custom_call.1} parent=1 // pred_check
      _
    $region19: #{tpu_custom_call.1} parent=1 // pred_check_branch
      %57 = sbr.rel (0) target = $region21
    $region20: #{tpu_custom_call.1} parent=1 // pred_region
      _
    $region21: #{tpu_custom_call.1} parent=1 // pred_fallthru
      _
    // Predicated region
    $region22: #{tpu_custom_call.1} parent=1 // pred_check
      _
    $region23: #{tpu_custom_call.1} parent=1 // pred_check_branch
      %59 = sbr.rel (0) target = $region25
    $region24: #{tpu_custom_call.1} parent=1 // pred_region
      %s61 = ssub.s32 1024, 1024
      %62 = vsyncadd [#allocation9], %s61
      %s63 = sshll.u32 [#allocation8], 4
      %s64 = int_to_ptr.vmem [resolvable:$true] %s63
      %69 = dma.hbm_to_vmem [thread:$0]  %s5, 1024, %s64, [#allocation9], 64, 64, 4
    $region25: #{tpu_custom_call.1} parent=1 // pred_fallthru
      _
    // Predicated region
    $region26: #{tpu_custom_call.1} parent=1 // pred_check
      _
    $region27: #{tpu_custom_call.1} parent=1 // pred_check_branch
      %71 = sbr.rel (0) target = $region29
    $region28: #{tpu_custom_call.1} parent=1 // pred_region
      _
    $region29: #{tpu_custom_call.1} parent=1 // pred_fallthru
      _
    // Predicated region
    $region30: #{tpu_custom_call.1} parent=1 // pred_check
      _
    $region31: #{tpu_custom_call.1} parent=1 // pred_check_branch
      %73 = sbr.rel (0) target = $region33
    $region32: #{tpu_custom_call.1} parent=1 // pred_region
      %s75 = ssub.s32 1024, 1024
      %76 = vsyncadd [#allocation9], %s75
      %s77 = sshll.u32 [#allocation10], 4
      %s78 = int_to_ptr.vmem [resolvable:$true] %s77
      %83 = dma.hbm_to_vmem [thread:$0]  %s7, 1024, %s78, [#allocation9], 64, 64, 4
    $region33: #{tpu_custom_call.1} parent=1 // pred_fallthru
      _
    // Predicated region
    $region34: #{tpu_custom_call.1} parent=1 // pred_check
      _
    $region35: #{tpu_custom_call.1} parent=1 // pred_check_branch
      %85 = sbr.rel (0) target = $region37
    $region36: #{tpu_custom_call.1} parent=1 // pred_region
      _
    $region37: #{tpu_custom_call.1} parent=1 // pred_fallthru
      _
    // Predicated region
    $region38: #{tpu_custom_call.1} parent=1 // pred_check
      _
    $region39: #{tpu_custom_call.1} parent=1 // pred_check_branch
      %87 = sbr.rel (0) target = $region41
    $region40: #{tpu_custom_call.1} parent=1 // pred_region
      %88 = dma.done [#allocation3], 128
    $region41: #{tpu_custom_call.1} parent=1 // pred_fallthru
      _
    // Predicated region
    $region42: #{tpu_custom_call.1} parent=1 // pred_check
      _
    $region43: #{tpu_custom_call.1} parent=1 // pred_check_branch
      %90 = sbr.rel (0) target = $region45
    $region44: #{tpu_custom_call.1} parent=1 // pred_region
      %91 = dma.done [#allocation6], 2048
    $region45: #{tpu_custom_call.1} parent=1 // pred_fallthru
      _
    // Predicated region
    $region46: #{tpu_custom_call.1} parent=1 // pred_check
      _
    $region47: #{tpu_custom_call.1} parent=1 // pred_check_branch
      %93 = sbr.rel (0) target = $region49
    $region48: #{tpu_custom_call.1} parent=1 // pred_region
      %94 = dma.done [#allocation6], 2048
    $region49: #{tpu_custom_call.1} parent=1 // pred_fallthru
      _
    // Predicated region
    $region50: #{tpu_custom_call.1} parent=1 // pred_check
      _
    $region51: #{tpu_custom_call.1} parent=1 // pred_check_branch
      %96 = sbr.rel (0) target = $region53
    $region52: #{tpu_custom_call.1} parent=1 // pred_region
      %97 = dma.done [#allocation9], 1024
    $region53: #{tpu_custom_call.1} parent=1 // pred_fallthru
      _
    // Predicated region
    $region54: #{tpu_custom_call.1} parent=1 // pred_check
      _
    $region55: #{tpu_custom_call.1} parent=1 // pred_check_branch
      %99 = sbr.rel (0) target = $region57
    $region56: #{tpu_custom_call.1} parent=1 // pred_region
      %100 = dma.done [#allocation9], 1024
    $region57: #{tpu_custom_call.1} parent=1 // pred_fallthru
      _
    %v102 = vld [vmem:[#allocation2] sm:$0xf]
    %v103 = vld [vmem:[#allocation2 + $0x4] sm:$0xf]
    %v104 = vld [vmem:[#allocation5] sm:$0xff]
    %v105 = vld [vmem:[#allocation5 + $0x8] sm:$0xff]
    %v106 = vld [vmem:[#allocation5 + $0x10] sm:$0xff]
    %v107 = vld [vmem:[#allocation5 + $0x18] sm:$0xff]
    %v108 = vld [vmem:[#allocation5 + $0x20] sm:$0xff]
    %v109 = vld [vmem:[#allocation5 + $0x28] sm:$0xff]
    %v110 = vld [vmem:[#allocation5 + $0x30] sm:$0xff]
    %v111 = vld [vmem:[#allocation5 + $0x38] sm:$0xff]
    %v112 = vld [vmem:[#allocation5 + $0x40] sm:$0xff]
    %v113 = vld [vmem:[#allocation5 + $0x48] sm:$0xff]
    %v114 = vld [vmem:[#allocation5 + $0x50] sm:$0xff]
    %v115 = vld [vmem:[#allocation5 + $0x58] sm:$0xff]
    %v116 = vld [vmem:[#allocation5 + $0x60] sm:$0xff]
    %v117 = vld [vmem:[#allocation5 + $0x68] sm:$0xff]
    %v118 = vld [vmem:[#allocation5 + $0x70] sm:$0xff]
    %v119 = vld [vmem:[#allocation5 + $0x78] sm:$0xff]
    %v120 = vld [vmem:[%s2] sm:$0x3]
    %v122 = vlaneseq
    %v123 = vshrl.u32 %v122, 7
    %v124 = vsub.s32 0, %v123
    %v125 = vrot.slane %v120, %v124
    %v126 = vlaneseq
    %v127 = vshrl.u32 %v126, 7
    %v128 = vsub.s32 1, %v127
    %v129 = vrot.slane %v120, %v128
    %v134 = vunpack.c.l.b16 %v102
    %v135 = vunpack.c.l.b16 %v103
    %v136 = vpack.c.b16 %v135, %v134
    %v154 = vunpack.c.l.b16 %v104
    %v155 = vunpack.c.h.b16 %v104
    %v156 = vunpack.c.l.b16 %v105
    %v157 = vunpack.c.h.b16 %v105
    %v158 = vunpack.c.l.b16 %v106
    %v159 = vunpack.c.h.b16 %v106
    %v160 = vunpack.c.l.b16 %v107
    %v161 = vunpack.c.h.b16 %v107
    %v162 = vunpack.c.l.b16 %v108
    %v163 = vunpack.c.h.b16 %v108
    %v164 = vunpack.c.l.b16 %v109
    %v165 = vunpack.c.h.b16 %v109
    %v166 = vunpack.c.l.b16 %v110
    %v167 = vunpack.c.h.b16 %v110
    %v168 = vunpack.c.l.b16 %v111
    %v169 = vunpack.c.h.b16 %v111
    %v170 = vunpack.c.l.b16 %v112
    %v171 = vunpack.c.h.b16 %v112
    %v172 = vunpack.c.l.b16 %v113
    %v173 = vunpack.c.h.b16 %v113
    %v174 = vunpack.c.l.b16 %v114
    %v175 = vunpack.c.h.b16 %v114
    %v176 = vunpack.c.l.b16 %v115
    %v177 = vunpack.c.h.b16 %v115
    %v178 = vunpack.c.l.b16 %v116
    %v179 = vunpack.c.h.b16 %v116
    %v180 = vunpack.c.l.b16 %v117
    %v181 = vunpack.c.h.b16 %v117
    %v182 = vunpack.c.l.b16 %v118
    %v183 = vunpack.c.h.b16 %v118
    %v184 = vunpack.c.l.b16 %v119
    %v185 = vunpack.c.h.b16 %v119
    %v186 = vpack.c.b16 %v156, %v154
    %v187 = vpack.c.b16 %v157, %v155
    %v188 = vpack.c.b16 %v160, %v158
    %v189 = vpack.c.b16 %v161, %v159
    %v190 = vpack.c.b16 %v164, %v162
    %v191 = vpack.c.b16 %v165, %v163
    %v192 = vpack.c.b16 %v168, %v166
    %v193 = vpack.c.b16 %v169, %v167
    %v194 = vpack.c.b16 %v172, %v170
    %v195 = vpack.c.b16 %v173, %v171
    %v196 = vpack.c.b16 %v176, %v174
    %v197 = vpack.c.b16 %v177, %v175
    %v198 = vpack.c.b16 %v180, %v178
    %v199 = vpack.c.b16 %v181, %v179
    %v200 = vpack.c.b16 %v184, %v182
    %v201 = vpack.c.b16 %v185, %v183
    %218 = vmatprep.subr.bf16.mxu0 %v187
    %219 = vmatpush1.bf16.msra.mxu0 %v186
    %220 = vmatprep.subr.bf16.mxu0 %v189
    %221 = vmatpush1.bf16.msra.mxu0 %v188
    %222 = vmatprep.subr.bf16.mxu0 %v191
    %223 = vmatpush1.bf16.msra.mxu0 %v190
    %224 = vmatprep.subr.bf16.mxu0 %v193
    %225 = vmatpush1.bf16.msra.mxu0 %v192
    %226 = vmatprep.subr.bf16.mxu0 %v195
    %227 = vmatpush1.bf16.msra.mxu0 %v194
    %228 = vmatprep.subr.bf16.mxu0 %v197
    %229 = vmatpush1.bf16.msra.mxu0 %v196
    %230 = vmatprep.subr.bf16.mxu0 %v199
    %231 = vmatpush1.bf16.msra.mxu0 %v198
    %232 = vmatprep.subr.bf16.mxu0 %v201
    %233 = vmatpush1.bf16.msra.mxu0 %v200
    %234 = vmatprep.subr.bf16.mxu0 0
    %235 = vmatpush1.bf16.msra.mxu0 0
    %236 = vmatprep.subr.bf16.mxu0 0
    %237 = vmatpush1.bf16.msra.mxu0 0
    %238 = vmatprep.subr.bf16.mxu0 0
    %239 = vmatpush1.bf16.msra.mxu0 0
    %240 = vmatprep.subr.bf16.mxu0 0
    %241 = vmatpush1.bf16.msra.mxu0 0
    %242 = vmatprep.subr.bf16.mxu0 0
    %243 = vmatpush1.bf16.msra.mxu0 0
    %244 = vmatprep.subr.bf16.mxu0 0
    %245 = vmatpush1.bf16.msra.mxu0 0
    %246 = vmatprep.subr.bf16.mxu0 0
    %247 = vmatpush1.bf16.msra.mxu0 0
    %248 = vmatprep.subr.bf16.mxu0 0
    %249 = vmatpush1.bf16.msra.mxu0 0
    %250 = vmatprep.mubr.bf16.mxu0 0
    %251 = vmatmul.mubr.bf16.gmra.mrb[0].mxu0 %v136
    %v252 = vpop.f32.mrb[0].mxu0
    %v253 = vadd.f32 %v125, %v252
    %v254 = vpop.f32.mrb[0].mxu0
    %v255 = vadd.f32 %v129, %v254
    %v256 = vpop.f32.mrb[0].mxu0
    %v257 = vadd.f32 %v125, %v256
    %v258 = vpop.f32.mrb[0].mxu0
    %v259 = vadd.f32 %v129, %v258
    %260 = vdwg.mxu0
    %vm261 = vcmp.ge.f32.partialorder %v253, 0.0
    %vm262 = vcmp.ge.f32.partialorder %v255, 0.0
    %vm263 = vcmp.ge.f32.partialorder %v257, 0.0
    %vm264 = vcmp.ge.f32.partialorder %v259, 0.0
    %v265 = vmul.f32 %v253, 0.22916667
    %v266 = vmul.f32 %v255, 0.22916667
    %v267 = vmul.f32 %v257, 0.22916667
    %v268 = vmul.f32 %v259, 0.22916667
    %v269 = vsel %vm261, %v253, %v265
    %v270 = vsel %vm262, %v255, %v266
    %v271 = vsel %vm263, %v257, %v267
    %v272 = vsel %vm264, %v259, %v268
    %v273 = vpack.c.bf16 %v271, %v269
    %v274 = vpack.c.bf16 %v272, %v270
    %v275 = vld [vmem:[#allocation7] sm:$0xf]
    %v276 = vld [vmem:[#allocation7 + $0x4] sm:$0xf]
    %v277 = vld [vmem:[#allocation7 + $0x8] sm:$0xf]
    %v278 = vld [vmem:[#allocation7 + $0xc] sm:$0xf]
    %v279 = vld [vmem:[#allocation7 + $0x10] sm:$0xf]
    %v280 = vld [vmem:[#allocation7 + $0x14] sm:$0xf]
    %v281 = vld [vmem:[#allocation7 + $0x18] sm:$0xf]
    %v282 = vld [vmem:[#allocation7 + $0x1c] sm:$0xf]
    %v283 = vld [vmem:[#allocation7 + $0x20] sm:$0xf]
    %v284 = vld [vmem:[#allocation7 + $0x24] sm:$0xf]
    %v285 = vld [vmem:[#allocation7 + $0x28] sm:$0xf]
    %v286 = vld [vmem:[#allocation7 + $0x2c] sm:$0xf]
    %v287 = vld [vmem:[#allocation7 + $0x30] sm:$0xf]
    %v288 = vld [vmem:[#allocation7 + $0x34] sm:$0xf]
    %v289 = vld [vmem:[#allocation7 + $0x38] sm:$0xf]
    %v290 = vld [vmem:[#allocation7 + $0x3c] sm:$0xf]
    %v291 = vld [vmem:[#allocation7 + $0x40] sm:$0xf]
    %v292 = vld [vmem:[#allocation7 + $0x44] sm:$0xf]
    %v293 = vld [vmem:[#allocation7 + $0x48] sm:$0xf]
    %v294 = vld [vmem:[#allocation7 + $0x4c] sm:$0xf]
    %v295 = vld [vmem:[#allocation7 + $0x50] sm:$0xf]
    %v296 = vld [vmem:[#allocation7 + $0x54] sm:$0xf]
    %v297 = vld [vmem:[#allocation7 + $0x58] sm:$0xf]
    %v298 = vld [vmem:[#allocation7 + $0x5c] sm:$0xf]
    %v299 = vld [vmem:[#allocation7 + $0x60] sm:$0xf]
    %v300 = vld [vmem:[#allocation7 + $0x64] sm:$0xf]
    %v301 = vld [vmem:[#allocation7 + $0x68] sm:$0xf]
    %v302 = vld [vmem:[#allocation7 + $0x6c] sm:$0xf]
    %v303 = vld [vmem:[#allocation7 + $0x70] sm:$0xf]
    %v304 = vld [vmem:[#allocation7 + $0x74] sm:$0xf]
    %v305 = vld [vmem:[#allocation7 + $0x78] sm:$0xf]
    %v306 = vld [vmem:[#allocation7 + $0x7c] sm:$0xf]
    %v307 = vld [vmem:[%s4] sm:$0x1]
    %v309 = vlaneseq
    %v310 = vshrl.u32 %v309, 7
    %v311 = vsub.s32 0, %v310
    %v312 = vrot.slane %v307, %v311
    %v346 = vunpack.c.l.b16 %v275
    %v347 = vunpack.c.l.b16 %v276
    %v348 = vunpack.c.l.b16 %v277
    %v349 = vunpack.c.l.b16 %v278
    %v350 = vunpack.c.l.b16 %v279
    %v351 = vunpack.c.l.b16 %v280
    %v352 = vunpack.c.l.b16 %v281
    %v353 = vunpack.c.l.b16 %v282
    %v354 = vunpack.c.l.b16 %v283
    %v355 = vunpack.c.l.b16 %v284
    %v356 = vunpack.c.l.b16 %v285
    %v357 = vunpack.c.l.b16 %v286
    %v358 = vunpack.c.l.b16 %v287
    %v359 = vunpack.c.l.b16 %v288
    %v360 = vunpack.c.l.b16 %v289
    %v361 = vunpack.c.l.b16 %v290
    %v362 = vunpack.c.l.b16 %v291
    %v363 = vunpack.c.l.b16 %v292
    %v364 = vunpack.c.l.b16 %v293
    %v365 = vunpack.c.l.b16 %v294
    %v366 = vunpack.c.l.b16 %v295
    %v367 = vunpack.c.l.b16 %v296
    %v368 = vunpack.c.l.b16 %v297
    %v369 = vunpack.c.l.b16 %v298
    %v370 = vunpack.c.l.b16 %v299
    %v371 = vunpack.c.l.b16 %v300
    %v372 = vunpack.c.l.b16 %v301
    %v373 = vunpack.c.l.b16 %v302
    %v374 = vunpack.c.l.b16 %v303
    %v375 = vunpack.c.l.b16 %v304
    %v376 = vunpack.c.l.b16 %v305
    %v377 = vunpack.c.l.b16 %v306
    %v378 = vpack.c.b16 %v347, %v346
    %v379 = vpack.c.b16 %v349, %v348
    %v380 = vpack.c.b16 %v351, %v350
    %v381 = vpack.c.b16 %v353, %v352
    %v382 = vpack.c.b16 %v355, %v354
    %v383 = vpack.c.b16 %v357, %v356
    %v384 = vpack.c.b16 %v359, %v358
    %v385 = vpack.c.b16 %v361, %v360
    %v386 = vpack.c.b16 %v363, %v362
    %v387 = vpack.c.b16 %v365, %v364
    %v388 = vpack.c.b16 %v367, %v366
    %v389 = vpack.c.b16 %v369, %v368
    %v390 = vpack.c.b16 %v371, %v370
    %v391 = vpack.c.b16 %v373, %v372
    %v392 = vpack.c.b16 %v375, %v374
    %v393 = vpack.c.b16 %v377, %v376
    %410 = vmatprep.subr.bf16.mxu0 0
    %411 = vmatpush1.bf16.msra.mxu0 %v378
    %412 = vmatprep.subr.bf16.mxu0 0
    %413 = vmatpush1.bf16.msra.mxu0 %v379
    %414 = vmatprep.subr.bf16.mxu0 0
    %415 = vmatpush1.bf16.msra.mxu0 %v380
    %416 = vmatprep.subr.bf16.mxu0 0
    %417 = vmatpush1.bf16.msra.mxu0 %v381
    %418 = vmatprep.subr.bf16.mxu0 0
    %419 = vmatpush1.bf16.msra.mxu0 %v382
    %420 = vmatprep.subr.bf16.mxu0 0
    %421 = vmatpush1.bf16.msra.mxu0 %v383
    %422 = vmatprep.subr.bf16.mxu0 0
    %423 = vmatpush1.bf16.msra.mxu0 %v384
    %424 = vmatprep.subr.bf16.mxu0 0
    %425 = vmatpush1.bf16.msra.mxu0 %v385
    %426 = vmatprep.subr.bf16.mxu0 0
    %427 = vmatpush1.bf16.msra.mxu0 %v386
    %428 = vmatprep.subr.bf16.mxu0 0
    %429 = vmatpush1.bf16.msra.mxu0 %v387
    %430 = vmatprep.subr.bf16.mxu0 0
    %431 = vmatpush1.bf16.msra.mxu0 %v388
    %432 = vmatprep.subr.bf16.mxu0 0
    %433 = vmatpush1.bf16.msra.mxu0 %v389
    %434 = vmatprep.subr.bf16.mxu0 0
    %435 = vmatpush1.bf16.msra.mxu0 %v390
    %436 = vmatprep.subr.bf16.mxu0 0
    %437 = vmatpush1.bf16.msra.mxu0 %v391
    %438 = vmatprep.subr.bf16.mxu0 0
    %439 = vmatpush1.bf16.msra.mxu0 %v392
    %440 = vmatprep.subr.bf16.mxu0 0
    %441 = vmatpush1.bf16.msra.mxu0 %v393
    %442 = vmatprep.mubr.bf16.mxu0 %v274
    %443 = vmatmul.mubr.bf16.gmra.mrb[0].mxu0 %v273
    %v444 = vpop.f32.mrb[0].mxu0
    %v445 = vadd.f32 %v312, %v444
    %v446 = vpop.f32.mrb[0].mxu0
    %v447 = vpop.f32.mrb[0].mxu0
    %v448 = vadd.f32 %v312, %v447
    %v449 = vpop.f32.mrb[0].mxu0
    %450 = vdwg.mxu0
    %v451 = vxor.u32 %v445, 2147483648
    %v452 = vxor.u32 %v448, 2147483648
    %v453 = vmul.f32 %v451, 1.442695
    %v454 = vpow.pop %v453
    %v455 = vmul.f32 %v452, 1.442695
    %v456 = vpow.pop %v455
    %v457 = vadd.f32 %v454, 1.0
    %v458 = vadd.f32 %v456, 1.0
    %v459 = vrcp.pop %v457
    %v460 = vmul.f32 1.0, %v459
    %v461 = vrcp.pop %v458
    %v462 = vmul.f32 1.0, %v461
    %v463 = vpack.c.bf16 %v462, %v460
    %v464 = vld [vmem:[#allocation8] sm:$0xf]
    %v465 = vld [vmem:[#allocation8 + $0x4] sm:$0xf]
    %v466 = vld [vmem:[#allocation8 + $0x8] sm:$0xf]
    %v467 = vld [vmem:[#allocation8 + $0xc] sm:$0xf]
    %v468 = vld [vmem:[#allocation8 + $0x10] sm:$0xf]
    %v469 = vld [vmem:[#allocation8 + $0x14] sm:$0xf]
    %v470 = vld [vmem:[#allocation8 + $0x18] sm:$0xf]
    %v471 = vld [vmem:[#allocation8 + $0x1c] sm:$0xf]
    %v472 = vld [vmem:[#allocation8 + $0x20] sm:$0xf]
    %v473 = vld [vmem:[#allocation8 + $0x24] sm:$0xf]
    %v474 = vld [vmem:[#allocation8 + $0x28] sm:$0xf]
    %v475 = vld [vmem:[#allocation8 + $0x2c] sm:$0xf]
    %v476 = vld [vmem:[#allocation8 + $0x30] sm:$0xf]
    %v477 = vld [vmem:[#allocation8 + $0x34] sm:$0xf]
    %v478 = vld [vmem:[#allocation8 + $0x38] sm:$0xf]
    %v479 = vld [vmem:[#allocation8 + $0x3c] sm:$0xf]
    %v480 = vld [vmem:[%s6] sm:$0x1]
    %v482 = vlaneseq
    %v483 = vshrl.u32 %v482, 7
    %v484 = vsub.s32 0, %v483
    %v485 = vrot.slane %v480, %v484
    %v503 = vunpack.c.l.b16 %v464
    %v504 = vunpack.c.l.b16 %v465
    %v505 = vunpack.c.l.b16 %v466
    %v506 = vunpack.c.l.b16 %v467
    %v507 = vunpack.c.l.b16 %v468
    %v508 = vunpack.c.l.b16 %v469
    %v509 = vunpack.c.l.b16 %v470
    %v510 = vunpack.c.l.b16 %v471
    %v511 = vunpack.c.l.b16 %v472
    %v512 = vunpack.c.l.b16 %v473
    %v513 = vunpack.c.l.b16 %v474
    %v514 = vunpack.c.l.b16 %v475
    %v515 = vunpack.c.l.b16 %v476
    %v516 = vunpack.c.l.b16 %v477
    %v517 = vunpack.c.l.b16 %v478
    %v518 = vunpack.c.l.b16 %v479
    %v519 = vpack.c.b16 %v504, %v503
    %v520 = vpack.c.b16 %v506, %v505
    %v521 = vpack.c.b16 %v508, %v507
    %v522 = vpack.c.b16 %v510, %v509
    %v523 = vpack.c.b16 %v512, %v511
    %v524 = vpack.c.b16 %v514, %v513
    %v525 = vpack.c.b16 %v516, %v515
    %v526 = vpack.c.b16 %v518, %v517
    %535 = vmatprep.subr.bf16.mxu0 0
    %536 = vmatpush1.bf16.msra.mxu0 %v519
    %537 = vmatprep.subr.bf16.mxu0 0
    %538 = vmatpush1.bf16.msra.mxu0 %v520
    %539 = vmatprep.subr.bf16.mxu0 0
    %540 = vmatpush1.bf16.msra.mxu0 %v521
    %541 = vmatprep.subr.bf16.mxu0 0
    %542 = vmatpush1.bf16.msra.mxu0 %v522
    %543 = vmatprep.subr.bf16.mxu0 0
    %544 = vmatpush1.bf16.msra.mxu0 %v523
    %545 = vmatprep.subr.bf16.mxu0 0
    %546 = vmatpush1.bf16.msra.mxu0 %v524
    %547 = vmatprep.subr.bf16.mxu0 0
    %548 = vmatpush1.bf16.msra.mxu0 %v525
    %549 = vmatprep.subr.bf16.mxu0 0
    %550 = vmatpush1.bf16.msra.mxu0 %v526
    %551 = vmatprep.subr.bf16.mxu0 0
    %552 = vmatpush1.bf16.msra.mxu0 0
    %553 = vmatprep.subr.bf16.mxu0 0
    %554 = vmatpush1.bf16.msra.mxu0 0
    %555 = vmatprep.subr.bf16.mxu0 0
    %556 = vmatpush1.bf16.msra.mxu0 0
    %557 = vmatprep.subr.bf16.mxu0 0
    %558 = vmatpush1.bf16.msra.mxu0 0
    %559 = vmatprep.subr.bf16.mxu0 0
    %560 = vmatpush1.bf16.msra.mxu0 0
    %561 = vmatprep.subr.bf16.mxu0 0
    %562 = vmatpush1.bf16.msra.mxu0 0
    %563 = vmatprep.subr.bf16.mxu0 0
    %564 = vmatpush1.bf16.msra.mxu0 0
    %565 = vmatprep.subr.bf16.mxu0 0
    %566 = vmatpush1.bf16.msra.mxu0 0
    %567 = vmatprep.mubr.bf16.mxu0 0
    %568 = vmatmul.mubr.bf16.gmra.mrb[0].mxu0 %v463
    %v569 = vpop.f32.mrb[0].mxu0
    %v570 = vadd.f32 %v485, %v569
    %v571 = vpop.f32.mrb[0].mxu0
    %v572 = vpop.f32.mrb[0].mxu0
    %v573 = vadd.f32 %v485, %v572
    %v574 = vpop.f32.mrb[0].mxu0
    %575 = vdwg.mxu0
    %vm576 = vcmp.ge.f32.partialorder %v570, 0.0
    %vm577 = vcmp.ge.f32.partialorder %v573, 0.0
    %v578 = vmul.f32 %v570, 0.22916667
    %v579 = vmul.f32 %v573, 0.22916667
    %v580 = vsel %vm576, %v570, %v578
    %v581 = vsel %vm577, %v573, %v579
    %v582 = vpack.c.bf16 %v581, %v580
    %v583 = vld [vmem:[#allocation10] sm:$0xf]
    %v584 = vld [vmem:[#allocation10 + $0x4] sm:$0xf]
    %v585 = vld [vmem:[#allocation10 + $0x8] sm:$0xf]
    %v586 = vld [vmem:[#allocation10 + $0xc] sm:$0xf]
    %v587 = vld [vmem:[#allocation10 + $0x10] sm:$0xf]
    %v588 = vld [vmem:[#allocation10 + $0x14] sm:$0xf]
    %v589 = vld [vmem:[#allocation10 + $0x18] sm:$0xf]
    %v590 = vld [vmem:[#allocation10 + $0x1c] sm:$0xf]
    %v591 = vld [vmem:[#allocation10 + $0x20] sm:$0xf]
    %v592 = vld [vmem:[#allocation10 + $0x24] sm:$0xf]
    %v593 = vld [vmem:[#allocation10 + $0x28] sm:$0xf]
    %v594 = vld [vmem:[#allocation10 + $0x2c] sm:$0xf]
    %v595 = vld [vmem:[#allocation10 + $0x30] sm:$0xf]
    %v596 = vld [vmem:[#allocation10 + $0x34] sm:$0xf]
    %v597 = vld [vmem:[#allocation10 + $0x38] sm:$0xf]
    %v598 = vld [vmem:[#allocation10 + $0x3c] sm:$0xf]
    %v599 = vld [vmem:[%s8] sm:$0x1]
    %v601 = vlaneseq
    %v602 = vshrl.u32 %v601, 7
    %v603 = vsub.s32 0, %v602
    %v604 = vrot.slane %v599, %v603
    %v622 = vunpack.c.l.b16 %v583
    %v623 = vunpack.c.l.b16 %v584
    %v624 = vunpack.c.l.b16 %v585
    %v625 = vunpack.c.l.b16 %v586
    %v626 = vunpack.c.l.b16 %v587
    %v627 = vunpack.c.l.b16 %v588
    %v628 = vunpack.c.l.b16 %v589
    %v629 = vunpack.c.l.b16 %v590
    %v630 = vunpack.c.l.b16 %v591
    %v631 = vunpack.c.l.b16 %v592
    %v632 = vunpack.c.l.b16 %v593
    %v633 = vunpack.c.l.b16 %v594
    %v634 = vunpack.c.l.b16 %v595
    %v635 = vunpack.c.l.b16 %v596
    %v636 = vunpack.c.l.b16 %v597
    %v637 = vunpack.c.l.b16 %v598
    %v638 = vpack.c.b16 %v623, %v622
    %v639 = vpack.c.b16 %v625, %v624
    %v640 = vpack.c.b16 %v627, %v626
    %v641 = vpack.c.b16 %v629, %v628
    %v642 = vpack.c.b16 %v631, %v630
    %v643 = vpack.c.b16 %v633, %v632
    %v644 = vpack.c.b16 %v635, %v634
    %v645 = vpack.c.b16 %v637, %v636
    %654 = vmatprep.subr.bf16.mxu0 0
    %655 = vmatpush1.bf16.msra.mxu0 %v638
    %656 = vmatprep.subr.bf16.mxu0 0
    %657 = vmatpush1.bf16.msra.mxu0 %v639
    %658 = vmatprep.subr.bf16.mxu0 0
    %659 = vmatpush1.bf16.msra.mxu0 %v640
    %660 = vmatprep.subr.bf16.mxu0 0
    %661 = vmatpush1.bf16.msra.mxu0 %v641
    %662 = vmatprep.subr.bf16.mxu0 0
    %663 = vmatpush1.bf16.msra.mxu0 %v642
    %664 = vmatprep.subr.bf16.mxu0 0
    %665 = vmatpush1.bf16.msra.mxu0 %v643
    %666 = vmatprep.subr.bf16.mxu0 0
    %667 = vmatpush1.bf16.msra.mxu0 %v644
    %668 = vmatprep.subr.bf16.mxu0 0
    %669 = vmatpush1.bf16.msra.mxu0 %v645
    %670 = vmatprep.subr.bf16.mxu0 0
    %671 = vmatpush1.bf16.msra.mxu0 0
    %672 = vmatprep.subr.bf16.mxu0 0
    %673 = vmatpush1.bf16.msra.mxu0 0
    %674 = vmatprep.subr.bf16.mxu0 0
    %675 = vmatpush1.bf16.msra.mxu0 0
    %676 = vmatprep.subr.bf16.mxu0 0
    %677 = vmatpush1.bf16.msra.mxu0 0
    %678 = vmatprep.subr.bf16.mxu0 0
    %679 = vmatpush1.bf16.msra.mxu0 0
    %680 = vmatprep.subr.bf16.mxu0 0
    %681 = vmatpush1.bf16.msra.mxu0 0
    %682 = vmatprep.subr.bf16.mxu0 0
    %683 = vmatpush1.bf16.msra.mxu0 0
    %684 = vmatprep.subr.bf16.mxu0 0
    %685 = vmatpush1.bf16.msra.mxu0 0
    %686 = vmatprep.mubr.bf16.mxu0 0
    %687 = vmatmul.mubr.bf16.gmra.mrb[0].mxu0 %v582
    %v688 = vpop.f32.mrb[0].mxu0
    %v689 = vadd.f32 %v604, %v688
    %v690 = vpop.f32.mrb[0].mxu0
    %v691 = vpop.f32.mrb[0].mxu0
    %v692 = vadd.f32 %v604, %v691
    %v693 = vpop.f32.mrb[0].mxu0
    %694 = vdwg.mxu0
    %vm695 = vcmp.ge.f32.partialorder %v689, 0.0
    %vm696 = vcmp.ge.f32.partialorder %v692, 0.0
    %v697 = vmul.f32 %v689, 0.22916667
    %v698 = vmul.f32 %v692, 0.22916667
    %v699 = vsel %vm695, %v689, %v697
    %v700 = vsel %vm696, %v692, %v698
    %701 = vst [vmem:[#allocation11] sm:$0xff] %v699
    %702 = vst [vmem:[#allocation11 + $0x8] sm:$0xff] %v700
    // Predicated region
    $region58: #{tpu_custom_call.1} parent=1 // pred_check
      _
    $region59: #{tpu_custom_call.1} parent=1 // pred_check_branch
      %704 = sbr.rel (0) target = $region61
    $region60: #{tpu_custom_call.1} parent=1 // pred_region
      %s706 = ssub.s32 256, 256
      %707 = vsyncadd [#allocation4], %s706
      %s708 = sshll.u32 [#allocation11], 4
      %s709 = int_to_ptr.vmem [resolvable:$true] %s708
      %714 = dma.vmem_to_hbm [thread:$0]  %s709, 256, %s9, [#allocation4], 128, 128, 8
    $region61: #{tpu_custom_call.1} parent=1 // pred_fallthru
      _
    // Predicated region
    $region62: #{tpu_custom_call.1} parent=1 // pred_check
      _
    $region63: #{tpu_custom_call.1} parent=1 // pred_check_branch
      %716 = sbr.rel (0) target = $region65
    $region64: #{tpu_custom_call.1} parent=1 // pred_region
      %717 = dma.done [#allocation4], 256
    $region65: #{tpu_custom_call.1} parent=1 // pred_fallthru
      _
    %718 = vsyncpa [#allocation3], 1
    %719 = vsyncpa [#allocation6], 1
    %720 = vsyncpa [#allocation9], 1
    %721 = vsyncpa [#allocation4], 1

</llo_original>
